<compile_context>
chip_gen: v7x
topology: tpu7x:2x2x1
jax: 0.10.0
libtpu: 0.0.40
codegen_flags: <defaults>
</compile_context>

<pallas_src>
import functools
import math

import jax
import jax.numpy as jnp
from jax.experimental import pallas as pl
from jax.experimental.pallas import tpu as pltpu

LOG_STD_MAX = 2.0
LOG_STD_MIN = -20.0
LN_EPS = 1e-5  # PyTorch nn.LayerNorm default eps

_ROW_ALIGN = 16  # bf16 sublane packing (and >= f32's 8)


def _round_up(x, m):
    return ((x + m - 1) // m) * m


def _actor_kernel(n_hidden, action_dim, *refs):
    """refs = [obs, (w, bgb) * n_hidden, w_head, b_head, out].

    obs and all weights are bf16; bgb is (3, h) f32 rows = (bias, gamma, beta).
    w_head is (h_last, 2*A) bf16, b_head is (1, 2*A) f32; output columns
    [A:2A] are the clipped log_std.
    """
    obs_ref = refs[0]
    w_head_ref = refs[-3]
    b_head_ref = refs[-2]
    out_ref = refs[-1]

    x16 = obs_ref[...].astype(jnp.bfloat16)   # bf16 LHS feeds the MXU

    idx = 1
    for _ in range(n_hidden):
        w_ref = refs[idx]
        p_ref = refs[idx + 1]
        idx += 2
        p = p_ref[...]
        b, g, be = p[0:1, :], p[1:2, :], p[2:3, :]

        # Linear (MXU, bf16 x bf16 -> f32) + bias
        h = jnp.dot(x16, w_ref[...], preferred_element_type=jnp.float32) + b

        # Single-pass LayerNorm stats: var = E[h^2] - mean^2 (f32).
        inv_n = 1.0 / h.shape[-1]
        mean = jnp.sum(h, axis=-1, keepdims=True) * inv_n
        mean_sq = jnp.sum(h * h, axis=-1, keepdims=True) * inv_n
        var = jnp.maximum(mean_sq - mean * mean, 0.0)
        inv = jax.lax.rsqrt(var + LN_EPS)      # EUP slot (nearly free)

        # Folded affine + ReLU: x = max(h*scale + shift, 0)
        scale = g * inv                        # (tb, h)
        shift = be - mean * scale
        x = jnp.maximum(h * scale + shift, 0.0)
        x16 = x.astype(jnp.bfloat16)

    # Fused mu / log_std head: single matmul, clip only the log_std half.
    head = jnp.dot(x16, w_head_ref[...], preferred_element_type=jnp.float32)
    head = head + b_head_ref[...]
    col = jax.lax.broadcasted_iota(jnp.int32, head.shape, 1)
    clipped = jnp.clip(head, LOG_STD_MIN, LOG_STD_MAX)
    out_ref[...] = jnp.where(col >= action_dim, clipped, head)


def pack_params(params):
    """One-time packing of raw params into the kernel-friendly layout.

    params: {'hidden': [(w, b, gamma, beta), ...], 'mu': (w, b),
             'log_std': (w, b)}  with weights already (in, out).
    Weights are cast to bf16 (MXU operands); bias/gamma/beta stay f32.
    """
    hidden = []
    for (w, b, g, be) in params["hidden"]:
        hidden.append((w.astype(jnp.bfloat16),
                       jnp.stack([b, g, be], axis=0).astype(jnp.float32)))
    w_mu, b_mu = params["mu"]
    w_ls, b_ls = params["log_std"]
    w_head = jnp.concatenate([w_mu, w_ls], axis=1).astype(jnp.bfloat16)  # (h, 2A)
    b_head = jnp.concatenate([b_mu, b_ls], axis=0).reshape(1, -1).astype(jnp.float32)
    return {
        "hidden": tuple(hidden),
        "head": (w_head, b_head),
        "action_dim": int(w_mu.shape[1]),
    }


def actor_gaussian_forward(obs, packed, block_batch=2048):
    """Returns (mu, log_std), each (batch, action_dim) in float32."""
    n_hidden = len(packed["hidden"])
    action_dim = packed["action_dim"]
    batch, obs_dim = obs.shape
    out_dim = 2 * action_dim

    # Row tile: 16-aligned (bf16 sublane packing), as large as the batch by
    # default so the grid has very few steps.  For big batches force >= 2
    # steps so "parallel" can shard across v7x's two TensorCores.
    padded = _round_up(max(batch, 1), _ROW_ALIGN)
    tb = min(_round_up(block_batch, _ROW_ALIGN), padded)
    if padded // tb < 2 and padded >= 512:
        tb = _round_up((padded + 1) // 2, _ROW_ALIGN)
    padded = _round_up(padded, tb)

    obs_p = obs.astype(jnp.bfloat16)  # halve the dominant HBM read
    if padded != batch:
        obs_p = jnp.pad(obs_p, ((0, padded - batch), (0, 0)))

    grid = (padded // tb,)

    flat_inputs = [obs_p]
    in_specs = [pl.BlockSpec((tb, obs_dim), lambda i: (i, 0))]
    for (w, bgb) in packed["hidden"]:
        flat_inputs += [w, bgb]
        in_specs += [
            pl.BlockSpec(w.shape, lambda i: (0, 0)),     # weights resident
            pl.BlockSpec(bgb.shape, lambda i: (0, 0)),
        ]
    w_head, b_head = packed["head"]
    flat_inputs += [w_head, b_head]
    in_specs += [
        pl.BlockSpec(w_head.shape, lambda i: (0, 0)),
        pl.BlockSpec(b_head.shape, lambda i: (0, 0)),
    ]

    # Advisory cost estimate for XLA's scheduler.
    flops = 0
    in_d = obs_dim
    for (w, _) in packed["hidden"]:
        h = w.shape[1]
        flops += 2 * padded * in_d * h          # matmul
        flops += 10 * padded * h                # LN + ReLU elementwise
        in_d = h
    flops += 2 * padded * in_d * out_dim
    param_bytes = sum(int(w.size) * 2 + int(p.size) * 4
                      for (w, p) in packed["hidden"])
    param_bytes += int(w_head.size) * 2 + int(b_head.size) * 4
    bytes_accessed = padded * obs_dim * 2 + padded * out_dim * 4 + param_bytes
    cost = pl.CostEstimate(flops=int(flops),
                           transcendentals=int(n_hidden * padded),
                           bytes_accessed=int(bytes_accessed))

    out = pl.pallas_call(
        functools.partial(_actor_kernel, n_hidden, action_dim),
        out_shape=jax.ShapeDtypeStruct((padded, out_dim), jnp.float32),
        grid=grid,
        in_specs=in_specs,
        out_specs=pl.BlockSpec((tb, out_dim), lambda i: (i, 0)),
        compiler_params=pltpu.CompilerParams(
            dimension_semantics=("parallel",),   # megacore on v7x
            vmem_limit_bytes=32 * 1024 * 1024),  # v5e default is only 16 MiB
        cost_estimate=cost,
    )(*flat_inputs)

    mu = out[:batch, :action_dim]
    log_std = out[:batch, action_dim:]
    return mu, log_std


def init_params(key, obs_dim, hidden_sizes, action_dim):
    """Mimics PyTorch nn.Linear default init U(-1/sqrt(fan_in), 1/sqrt(fan_in));
    LayerNorm affine = (1, 0). Weights stored as (in, out), float32."""
    params = {"hidden": []}
    in_dim = obs_dim
    for h in hidden_sizes:
        key, kw, kb = jax.random.split(key, 3)
        bound = 1.0 / math.sqrt(in_dim)
        w = jax.random.uniform(kw, (in_dim, h), jnp.float32, -bound, bound)
        b = jax.random.uniform(kb, (h,), jnp.float32, -bound, bound)
        gamma = jnp.ones((h,), jnp.float32)
        beta = jnp.zeros((h,), jnp.float32)
        params["hidden"].append((w, b, gamma, beta))
        in_dim = h
    for name in ("mu", "log_std"):
        key, kw, kb = jax.random.split(key, 3)
        bound = 1.0 / math.sqrt(in_dim)
        w = jax.random.uniform(kw, (in_dim, action_dim), jnp.float32, -bound, bound)
        b = jax.random.uniform(kb, (action_dim,), jnp.float32, -bound, bound)
        params[name] = (w, b)
    return params


def reference_forward(obs, params):
    """Pure-JAX f32 reference of the PyTorch forward (correctness check)."""
    x = obs
    for (w, b, g, be) in params["hidden"]:
        h = x @ w + b
        mean = jnp.mean(h, axis=-1, keepdims=True)
        var = jnp.mean(jnp.square(h - mean), axis=-1, keepdims=True)
        h = (h - mean) / jnp.sqrt(var + LN_EPS) * g + be
        x = jnp.maximum(h, 0.0)
    mu = x @ params["mu"][0] + params["mu"][1]
    ls = jnp.clip(x @ params["log_std"][0] + params["log_std"][1],
                  LOG_STD_MIN, LOG_STD_MAX)
    return mu, ls


if __name__ == "__main__":
    # Small shapes consistent with the module: cfg['hidden'] = [32, 32]
    batch, obs_dim, action_dim = 2, 16, 4
    hidden_sizes = [32, 32]

    key = jax.random.PRNGKey(0)
    key, k_obs = jax.random.split(key)
    obs = jax.random.normal(k_obs, (batch, obs_dim), jnp.float32)

    params = init_params(key, obs_dim, hidden_sizes, action_dim)
    packed = pack_params(params)   # done once; reused across calls

    # Tiny-batch path (single grid step, batch padded to 16 rows).
    mu, log_std = actor_gaussian_forward(obs, packed)
    jax.block_until_ready((mu, log_std))

    mu_ref, ls_ref = reference_forward(obs, params)
    assert mu.shape == (batch, action_dim) and log_std.shape == (batch, action_dim)
    # bf16 MXU operands + single-pass variance -> tolerances loosened vs f32 ref.
    assert jnp.allclose(mu, mu_ref, atol=5e-2, rtol=5e-2)
    assert jnp.allclose(log_std, ls_ref, atol=5e-2, rtol=5e-2)

    # Larger batch exercising the row grid (multiple blocks + padding path).
    key, k_obs2 = jax.random.split(key)
    obs2 = jax.random.normal(k_obs2, (40, obs_dim), jnp.float32)
    mu2, ls2 = actor_gaussian_forward(obs2, packed, block_batch=16)
    jax.block_until_ready((mu2, ls2))
    mu2_ref, ls2_ref = reference_forward(obs2, params)
    assert jnp.allclose(mu2, mu2_ref, atol=5e-2, rtol=5e-2)
    assert jnp.allclose(ls2, ls2_ref, atol=5e-2, rtol=5e-2)

    # TODO(synk): `compute()` (rsample + tanh-squashed log-prob) needs Gaussian
    # sampling; only the deterministic forward() hot path is implemented here.
    print("KERNEL_OK")
</pallas_src>

<mosaic_0001>
module attributes {stable_mosaic.version = 11 : i64} {
  func.func @_actor_kernel(%arg0: i32, %arg1: memref<16x16xbf16, #tpu.memory_space<vmem>>, %arg2: memref<16x32xbf16, #tpu.memory_space<vmem>>, %arg3: memref<3x32xf32, #tpu.memory_space<vmem>>, %arg4: memref<32x32xbf16, #tpu.memory_space<vmem>>, %arg5: memref<3x32xf32, #tpu.memory_space<vmem>>, %arg6: memref<32x8xbf16, #tpu.memory_space<vmem>>, %arg7: memref<1x8xf32, #tpu.memory_space<vmem>>, %arg8: memref<16x8xf32, #tpu.memory_space<vmem>>) attributes {dimension_semantics = [#tpu.dimension_semantics<parallel>], iteration_bounds = array<i64: 1>, scalar_prefetch = 0 : i64, scratch_operands = 0 : i64, tpu.core_type = #tpu.core_type<tc>, window_params = [{transform_indices = @transform_0, window_bounds = array<i64: 16, 16>}, {pipeline_mode = #tpu.pipeline_mode<synchronous>, transform_indices = @transform_1, window_bounds = array<i64: 16, 32>}, {pipeline_mode = #tpu.pipeline_mode<synchronous>, transform_indices = @transform_2, window_bounds = array<i64: 3, 32>}, {pipeline_mode = #tpu.pipeline_mode<synchronous>, transform_indices = @transform_3, window_bounds = array<i64: 32, 32>}, {pipeline_mode = #tpu.pipeline_mode<synchronous>, transform_indices = @transform_4, window_bounds = array<i64: 3, 32>}, {pipeline_mode = #tpu.pipeline_mode<synchronous>, transform_indices = @transform_5, window_bounds = array<i64: 32, 8>}, {pipeline_mode = #tpu.pipeline_mode<synchronous>, transform_indices = @transform_6, window_bounds = array<i64: 1, 8>}, {transform_indices = @transform_7, window_bounds = array<i64: 16, 8>}]} {
    %c0 = arith.constant 0 : index
    %c0_0 = arith.constant 0 : index
    %0 = vector.load %arg1[%c0, %c0_0] : memref<16x16xbf16, #tpu.memory_space<vmem>>, vector<16x16xbf16>
    %c0_1 = arith.constant 0 : index
    %c0_2 = arith.constant 0 : index
    %1 = vector.load %arg3[%c0_1, %c0_2] : memref<3x32xf32, #tpu.memory_space<vmem>>, vector<3x32xf32>
    %2 = vector.extract_strided_slice %1 {offsets = [0, 0], sizes = [1, 32], strides = [1, 1]} : vector<3x32xf32> to vector<1x32xf32>
    %3 = vector.extract_strided_slice %1 {offsets = [1, 0], sizes = [1, 32], strides = [1, 1]} : vector<3x32xf32> to vector<1x32xf32>
    %4 = vector.extract_strided_slice %1 {offsets = [2, 0], sizes = [1, 32], strides = [1, 1]} : vector<3x32xf32> to vector<1x32xf32>
    %c0_3 = arith.constant 0 : index
    %c0_4 = arith.constant 0 : index
    %5 = vector.load %arg2[%c0_3, %c0_4] : memref<16x32xbf16, #tpu.memory_space<vmem>>, vector<16x32xbf16>
    %cst = arith.constant dense<0.000000e+00> : vector<16x32xf32>
    %6 = tpu.matmul %0, %5, %cst {dimension_numbers = #tpu.dot_dimension_numbers<[1], [0], [0], [1], [0, 0, 1, 1], [], []>} : vector<16x16xbf16>, vector<16x32xbf16>, vector<16x32xf32> -> vector<16x32xf32>
    %7 = vector.broadcast %2 : vector<1x32xf32> to vector<16x32xf32>
    %8 = arith.addf %6, %7 : vector<16x32xf32>
    %cst_5 = arith.constant dense<0.000000e+00> : vector<16xf32>
    %9 = vector.multi_reduction <add>, %8, %cst_5 [1] : vector<16x32xf32> to vector<16xf32>
    %10 = vector.shape_cast %9 : vector<16xf32> to vector<16x1xf32>
    %cst_6 = arith.constant 3.125000e-02 : f32
    %11 = vector.broadcast %cst_6 : f32 to vector<16x1xf32>
    %12 = arith.mulf %10, %11 : vector<16x1xf32>
    %13 = arith.mulf %8, %8 : vector<16x32xf32>
    %cst_7 = arith.constant dense<0.000000e+00> : vector<16xf32>
    %14 = vector.multi_reduction <add>, %13, %cst_7 [1] : vector<16x32xf32> to vector<16xf32>
    %15 = vector.shape_cast %14 : vector<16xf32> to vector<16x1xf32>
    %cst_8 = arith.constant 3.125000e-02 : f32
    %16 = vector.broadcast %cst_8 : f32 to vector<16x1xf32>
    %17 = arith.mulf %15, %16 : vector<16x1xf32>
    %18 = arith.mulf %12, %12 : vector<16x1xf32>
    %19 = arith.subf %17, %18 : vector<16x1xf32>
    %cst_9 = arith.constant 0.000000e+00 : f32
    %20 = vector.broadcast %cst_9 : f32 to vector<16x1xf32>
    %21 = arith.maximumf %19, %20 : vector<16x1xf32>
    %cst_10 = arith.constant 9.99999974E-6 : f32
    %22 = vector.broadcast %cst_10 : f32 to vector<16x1xf32>
    %23 = arith.addf %21, %22 : vector<16x1xf32>
    %24 = math.rsqrt %23 : vector<16x1xf32>
    %25 = vector.broadcast %3 : vector<1x32xf32> to vector<16x32xf32>
    %26 = vector.broadcast %24 : vector<16x1xf32> to vector<16x32xf32>
    %27 = arith.mulf %25, %26 : vector<16x32xf32>
    %28 = vector.broadcast %12 : vector<16x1xf32> to vector<16x32xf32>
    %29 = arith.mulf %28, %27 : vector<16x32xf32>
    %30 = vector.broadcast %4 : vector<1x32xf32> to vector<16x32xf32>
    %31 = arith.subf %30, %29 : vector<16x32xf32>
    %32 = arith.mulf %8, %27 : vector<16x32xf32>
    %33 = arith.addf %32, %31 : vector<16x32xf32>
    %cst_11 = arith.constant 0.000000e+00 : f32
    %34 = vector.broadcast %cst_11 : f32 to vector<16x32xf32>
    %35 = arith.maximumf %33, %34 : vector<16x32xf32>
    %36 = arith.truncf %35 : vector<16x32xf32> to vector<16x32xbf16>
    %c0_12 = arith.constant 0 : index
    %c0_13 = arith.constant 0 : index
    %37 = vector.load %arg5[%c0_12, %c0_13] : memref<3x32xf32, #tpu.memory_space<vmem>>, vector<3x32xf32>
    %38 = vector.extract_strided_slice %37 {offsets = [0, 0], sizes = [1, 32], strides = [1, 1]} : vector<3x32xf32> to vector<1x32xf32>
    %39 = vector.extract_strided_slice %37 {offsets = [1, 0], sizes = [1, 32], strides = [1, 1]} : vector<3x32xf32> to vector<1x32xf32>
    %40 = vector.extract_strided_slice %37 {offsets = [2, 0], sizes = [1, 32], strides = [1, 1]} : vector<3x32xf32> to vector<1x32xf32>
    %c0_14 = arith.constant 0 : index
    %c0_15 = arith.constant 0 : index
    %41 = vector.load %arg4[%c0_14, %c0_15] : memref<32x32xbf16, #tpu.memory_space<vmem>>, vector<32x32xbf16>
    %cst_16 = arith.constant dense<0.000000e+00> : vector<16x32xf32>
    %42 = tpu.matmul %36, %41, %cst_16 {dimension_numbers = #tpu.dot_dimension_numbers<[1], [0], [0], [1], [0, 0, 1, 1], [], []>} : vector<16x32xbf16>, vector<32x32xbf16>, vector<16x32xf32> -> vector<16x32xf32>
    %43 = vector.broadcast %38 : vector<1x32xf32> to vector<16x32xf32>
    %44 = arith.addf %42, %43 : vector<16x32xf32>
    %cst_17 = arith.constant dense<0.000000e+00> : vector<16xf32>
    %45 = vector.multi_reduction <add>, %44, %cst_17 [1] : vector<16x32xf32> to vector<16xf32>
    %46 = vector.shape_cast %45 : vector<16xf32> to vector<16x1xf32>
    %cst_18 = arith.constant 3.125000e-02 : f32
    %47 = vector.broadcast %cst_18 : f32 to vector<16x1xf32>
    %48 = arith.mulf %46, %47 : vector<16x1xf32>
    %49 = arith.mulf %44, %44 : vector<16x32xf32>
    %cst_19 = arith.constant dense<0.000000e+00> : vector<16xf32>
    %50 = vector.multi_reduction <add>, %49, %cst_19 [1] : vector<16x32xf32> to vector<16xf32>
    %51 = vector.shape_cast %50 : vector<16xf32> to vector<16x1xf32>
    %cst_20 = arith.constant 3.125000e-02 : f32
    %52 = vector.broadcast %cst_20 : f32 to vector<16x1xf32>
    %53 = arith.mulf %51, %52 : vector<16x1xf32>
    %54 = arith.mulf %48, %48 : vector<16x1xf32>
    %55 = arith.subf %53, %54 : vector<16x1xf32>
    %cst_21 = arith.constant 0.000000e+00 : f32
    %56 = vector.broadcast %cst_21 : f32 to vector<16x1xf32>
    %57 = arith.maximumf %55, %56 : vector<16x1xf32>
    %cst_22 = arith.constant 9.99999974E-6 : f32
    %58 = vector.broadcast %cst_22 : f32 to vector<16x1xf32>
    %59 = arith.addf %57, %58 : vector<16x1xf32>
    %60 = math.rsqrt %59 : vector<16x1xf32>
    %61 = vector.broadcast %39 : vector<1x32xf32> to vector<16x32xf32>
    %62 = vector.broadcast %60 : vector<16x1xf32> to vector<16x32xf32>
    %63 = arith.mulf %61, %62 : vector<16x32xf32>
    %64 = vector.broadcast %48 : vector<16x1xf32> to vector<16x32xf32>
    %65 = arith.mulf %64, %63 : vector<16x32xf32>
    %66 = vector.broadcast %40 : vector<1x32xf32> to vector<16x32xf32>
    %67 = arith.subf %66, %65 : vector<16x32xf32>
    %68 = arith.mulf %44, %63 : vector<16x32xf32>
    %69 = arith.addf %68, %67 : vector<16x32xf32>
    %cst_23 = arith.constant 0.000000e+00 : f32
    %70 = vector.broadcast %cst_23 : f32 to vector<16x32xf32>
    %71 = arith.maximumf %69, %70 : vector<16x32xf32>
    %72 = arith.truncf %71 : vector<16x32xf32> to vector<16x32xbf16>
    %c0_24 = arith.constant 0 : index
    %c0_25 = arith.constant 0 : index
    %73 = vector.load %arg6[%c0_24, %c0_25] : memref<32x8xbf16, #tpu.memory_space<vmem>>, vector<32x8xbf16>
    %cst_26 = arith.constant dense<0.000000e+00> : vector<16x8xf32>
    %74 = tpu.matmul %72, %73, %cst_26 {dimension_numbers = #tpu.dot_dimension_numbers<[1], [0], [0], [1], [0, 0, 1, 1], [], []>} : vector<16x32xbf16>, vector<32x8xbf16>, vector<16x8xf32> -> vector<16x8xf32>
    %c0_27 = arith.constant 0 : index
    %c0_28 = arith.constant 0 : index
    %75 = vector.load %arg7[%c0_27, %c0_28] : memref<1x8xf32, #tpu.memory_space<vmem>>, vector<1x8xf32>
    %76 = vector.broadcast %75 : vector<1x8xf32> to vector<16x8xf32>
    %77 = arith.addf %74, %76 : vector<16x8xf32>
    %78 = tpu.iota {dimensions = array<i32: 1>} : vector<16x8xi32>
    %cst_29 = arith.constant -2.000000e+01 : f32
    %cst_30 = arith.constant 2.000000e+00 : f32
    %79 = vector.broadcast %cst_29 : f32 to vector<16x8xf32>
    %80 = arith.maximumf %79, %77 : vector<16x8xf32>
    %81 = vector.broadcast %cst_30 : f32 to vector<16x8xf32>
    %82 = arith.minimumf %81, %80 : vector<16x8xf32>
    %c4_i32 = arith.constant 4 : i32
    %83 = vector.broadcast %c4_i32 : i32 to vector<16x8xi32>
    %84 = arith.cmpi sge, %78, %83 : vector<16x8xi32>
    %85 = arith.select %84, %82, %77 : vector<16x8xi1>, vector<16x8xf32>
    %c0_31 = arith.constant 0 : index
    %c0_32 = arith.constant 0 : index
    %86 = vector.load %arg8[%c0_31, %c0_32] : memref<16x8xf32, #tpu.memory_space<vmem>>, vector<16x8xf32>
    tpu.vector_store %arg8[%c0_31, %c0_32], %85 {strides = array<i32>} : memref<16x8xf32, #tpu.memory_space<vmem>>, vector<16x8xf32>,
    return
  }
  func.func @transform_0(%arg0: i32) -> (i32, i32) {
    %c0_i32 = arith.constant 0 : i32
    %c0_i32_0 = arith.constant 0 : i32
    return %arg0, %c0_i32 : i32, i32
  }
  func.func @transform_1(%arg0: i32) -> (i32, i32) {
    %c0_i32 = arith.constant 0 : i32
    %c0_i32_0 = arith.constant 0 : i32
    %c0_i32_1 = arith.constant 0 : i32
    return %c0_i32, %c0_i32_0 : i32, i32
  }
  func.func @transform_2(%arg0: i32) -> (i32, i32) {
    %c0_i32 = arith.constant 0 : i32
    %c0_i32_0 = arith.constant 0 : i32
    %c0_i32_1 = arith.constant 0 : i32
    return %c0_i32, %c0_i32_0 : i32, i32
  }
  func.func @transform_3(%arg0: i32) -> (i32, i32) {
    %c0_i32 = arith.constant 0 : i32
    %c0_i32_0 = arith.constant 0 : i32
    %c0_i32_1 = arith.constant 0 : i32
    return %c0_i32, %c0_i32_0 : i32, i32
  }
  func.func @transform_4(%arg0: i32) -> (i32, i32) {
    %c0_i32 = arith.constant 0 : i32
    %c0_i32_0 = arith.constant 0 : i32
    %c0_i32_1 = arith.constant 0 : i32
    return %c0_i32, %c0_i32_0 : i32, i32
  }
  func.func @transform_5(%arg0: i32) -> (i32, i32) {
    %c0_i32 = arith.constant 0 : i32
    %c0_i32_0 = arith.constant 0 : i32
    %c0_i32_1 = arith.constant 0 : i32
    return %c0_i32, %c0_i32_0 : i32, i32
  }
  func.func @transform_6(%arg0: i32) -> (i32, i32) {
    %c0_i32 = arith.constant 0 : i32
    %c0_i32_0 = arith.constant 0 : i32
    %c0_i32_1 = arith.constant 0 : i32
    return %c0_i32, %c0_i32_0 : i32, i32
  }
  func.func @transform_7(%arg0: i32) -> (i32, i32) {
    %c0_i32 = arith.constant 0 : i32
    %c0_i32_0 = arith.constant 0 : i32
    return %arg0, %c0_i32 : i32, i32
  }
}

</mosaic_0001>

<llo_original>
// kernel: tpu_custom_call.1
$region0: #{tpu_custom_call.1}
  #allocation0 [shape = 'u32[]', space=smem, size = 0x4, offset = 0x4, fixed_abs, tag = 'smem constant byte address 0x4 - core index']
  #allocation1 [shape = 'u32[144,128]{1,0:T(1,128)}', space=vmem, size = 0x12000, scoped, tag = 'internal scratch']
  %s0 = inlined_call_operand.vmem [shape: bf16[16,16], index: 0, kind: input, shape index: {}]
  %s1 = inlined_call_operand.hbm [shape: bf16[16,32], index: 1, kind: input, shape index: {}]
  %s2 = inlined_call_operand.vmem [shape: f32[3,32], index: 2, kind: input, shape index: {}]
  %s3 = inlined_call_operand.vmem [shape: bf16[32,32], index: 3, kind: input, shape index: {}]
  %s4 = inlined_call_operand.hbm [shape: f32[3,32], index: 4, kind: input, shape index: {}]
  %s5 = inlined_call_operand.vmem [shape: bf16[32,8], index: 5, kind: input, shape index: {}]
  %s6 = inlined_call_operand.vmem [shape: f32[1,8], index: 6, kind: input, shape index: {}]
  %s7 = inlined_call_operand.vmem [shape: f32[16,8], index: 7, kind: output, shape index: {}]
  %s8 = sld [smem:[#allocation0]]
  $region46: #{tpu_custom_call.1} parent=0
    _
  %s10 = ssub.s32 1, %s8
  %s11 = scalar_select 0, %s10, %s8
  $region1: #{tpu_custom_call.1} parent=0
    #allocation2 [shape = 'u8[4096]{0}', space=vmem, size = 0x1000, scoped, tag = 'input window, operand 1, single buffered']
    #allocation3 [shape = 's32[1]{0}', space=sflag, size = 0x4, scoped, tag = 'scoped memory for tpu_custom_call.1']
    #allocation4 [shape = 'u8[2048]{0}', space=vmem, size = 0x800, scoped, tag = 'input window, operand 4, single buffered']
    #allocation5 [shape = 's32[1]{0}', space=sflag, size = 0x4, scoped, tag = 'scoped memory for tpu_custom_call.1']
    %12 = vsyncpa [#allocation3], 0
    %13 = vsyncpa [#allocation5], 0
    // Predicated region
    $region2: #{tpu_custom_call.1} parent=1 // pred_check
      _
    $region3: #{tpu_custom_call.1} parent=1 // pred_check_branch
      %15 = sbr.rel (0) target = $region5
    $region4: #{tpu_custom_call.1} parent=1 // pred_region
      _
    $region5: #{tpu_custom_call.1} parent=1 // pred_fallthru
      _
    // Predicated region
    $region6: #{tpu_custom_call.1} parent=1 // pred_check
      _
    $region7: #{tpu_custom_call.1} parent=1 // pred_check_branch
      %17 = sbr.rel (0) target = $region9
    $region8: #{tpu_custom_call.1} parent=1 // pred_region
      %s19 = ssub.s32 128, 128
      %20 = vsyncadd [#allocation3], %s19
      %s21 = sshll.u32 [#allocation2], 4
      %s22 = int_to_ptr.vmem [resolvable:$true] %s21
      %27 = dma.hbm_to_vmem [thread:$0]  %s1, 128, %s22, [#allocation3], 64, 64, 4
    $region9: #{tpu_custom_call.1} parent=1 // pred_fallthru
      _
    // Predicated region
    $region10: #{tpu_custom_call.1} parent=1 // pred_check
      _
    $region11: #{tpu_custom_call.1} parent=1 // pred_check_branch
      %29 = sbr.rel (0) target = $region13
    $region12: #{tpu_custom_call.1} parent=1 // pred_region
      _
    $region13: #{tpu_custom_call.1} parent=1 // pred_fallthru
      _
    // Predicated region
    $region14: #{tpu_custom_call.1} parent=1 // pred_check
      _
    $region15: #{tpu_custom_call.1} parent=1 // pred_check_branch
      %31 = sbr.rel (0) target = $region17
    $region16: #{tpu_custom_call.1} parent=1 // pred_region
      _
    $region17: #{tpu_custom_call.1} parent=1 // pred_fallthru
      _
    // Predicated region
    $region18: #{tpu_custom_call.1} parent=1 // pred_check
      _
    $region19: #{tpu_custom_call.1} parent=1 // pred_check_branch
      %33 = sbr.rel (0) target = $region21
    $region20: #{tpu_custom_call.1} parent=1 // pred_region
      %s35 = ssub.s32 64, 64
      %36 = vsyncadd [#allocation5], %s35
      %s38 = sshll.u32 [#allocation4], 4
      %s39 = int_to_ptr.vmem [resolvable:$true] %s38
      %41 = dma.hbm_to_vmem [thread:$0]  %s4, 64, %s39, [#allocation5]
    $region21: #{tpu_custom_call.1} parent=1 // pred_fallthru
      _
    // Predicated region
    $region22: #{tpu_custom_call.1} parent=1 // pred_check
      _
    $region23: #{tpu_custom_call.1} parent=1 // pred_check_branch
      %43 = sbr.rel (0) target = $region25
    $region24: #{tpu_custom_call.1} parent=1 // pred_region
      _
    $region25: #{tpu_custom_call.1} parent=1 // pred_fallthru
      _
    // Predicated region
    $region26: #{tpu_custom_call.1} parent=1 // pred_check
      _
    $region27: #{tpu_custom_call.1} parent=1 // pred_check_branch
      %45 = sbr.rel (0) target = $region29
    $region28: #{tpu_custom_call.1} parent=1 // pred_region
      _
    $region29: #{tpu_custom_call.1} parent=1 // pred_fallthru
      _
    // Predicated region
    $region30: #{tpu_custom_call.1} parent=1 // pred_check
      _
    $region31: #{tpu_custom_call.1} parent=1 // pred_check_branch
      %47 = sbr.rel (0) target = $region33
    $region32: #{tpu_custom_call.1} parent=1 // pred_region
      %48 = dma.done [#allocation3], 128
    $region33: #{tpu_custom_call.1} parent=1 // pred_fallthru
      _
    // Predicated region
    $region34: #{tpu_custom_call.1} parent=1 // pred_check
      _
    $region35: #{tpu_custom_call.1} parent=1 // pred_check_branch
      %50 = sbr.rel (0) target = $region37
    $region36: #{tpu_custom_call.1} parent=1 // pred_region
      %51 = dma.done [#allocation5], 64
    $region37: #{tpu_custom_call.1} parent=1 // pred_fallthru
      _
    %v53 = vld [vmem:[%s0] sm:$0xf]
    %v54 = vld [vmem:[%s0 + $0x4] sm:$0xf]
    %v55 = vld [vmem:[%s2] sm:$0x7]
    %v56 = vld [vmem:[#allocation2] sm:$0xf]
    %v57 = vld [vmem:[#allocation2 + $0x4] sm:$0xf]
    %v58 = vlaneseq
    %v59 = vshrl.u32 %v58, 7
    %v60 = vsub.s32 0, %v59
    %v61 = vrot.slane %v55, %v60
    %v64 = vunpack.c.l.b16 %v53
    %v65 = vunpack.c.l.b16 %v54
    %v66 = vpack.c.b16 %v65, %v64
    %v69 = vunpack.c.l.b16 %v56
    %v70 = vunpack.c.l.b16 %v57
    %v71 = vpack.c.b16 %v70, %v69
    %vm73 = vcmask 130048
    %v75 = vsel %vm73, %v66, 0
    %77 = vmatprep.subr.bf16.mxu0 0
    %78 = vmatpush1.bf16.msra.mxu0 %v71
    %79 = vmatprep.subr.bf16.mxu0 0
    %80 = vmatpush1.bf16.msra.mxu0 0
    %81 = vmatprep.subr.bf16.mxu0 0
    %82 = vmatpush1.bf16.msra.mxu0 0
    %83 = vmatprep.subr.bf16.mxu0 0
    %84 = vmatpush1.bf16.msra.mxu0 0
    %85 = vmatprep.subr.bf16.mxu0 0
    %86 = vmatpush1.bf16.msra.mxu0 0
    %87 = vmatprep.subr.bf16.mxu0 0
    %88 = vmatpush1.bf16.msra.mxu0 0
    %89 = vmatprep.subr.bf16.mxu0 0
    %90 = vmatpush1.bf16.msra.mxu0 0
    %91 = vmatprep.subr.bf16.mxu0 0
    %92 = vmatpush1.bf16.msra.mxu0 0
    %93 = vmatprep.subr.bf16.mxu0 0
    %94 = vmatpush1.bf16.msra.mxu0 0
    %95 = vmatprep.subr.bf16.mxu0 0
    %96 = vmatpush1.bf16.msra.mxu0 0
    %97 = vmatprep.subr.bf16.mxu0 0
    %98 = vmatpush1.bf16.msra.mxu0 0
    %99 = vmatprep.subr.bf16.mxu0 0
    %100 = vmatpush1.bf16.msra.mxu0 0
    %101 = vmatprep.subr.bf16.mxu0 0
    %102 = vmatpush1.bf16.msra.mxu0 0
    %103 = vmatprep.subr.bf16.mxu0 0
    %104 = vmatpush1.bf16.msra.mxu0 0
    %105 = vmatprep.subr.bf16.mxu0 0
    %106 = vmatpush1.bf16.msra.mxu0 0
    %107 = vmatprep.subr.bf16.mxu0 0
    %108 = vmatpush1.bf16.msra.mxu0 0
    %109 = vmatprep.mubr.bf16.mxu0 0
    %110 = vmatmul.mubr.bf16.gmra.mrb[0].mxu0 %v75
    %v111 = vpop.f32.mrb[0].mxu0
    %v112 = vadd.f32 %v61, %v111
    %v113 = vpop.f32.mrb[0].mxu0
    %v114 = vpop.f32.mrb[0].mxu0
    %v115 = vadd.f32 %v61, %v114
    %v116 = vpop.f32.mrb[0].mxu0
    %117 = vdwg.mxu0
    %vm118 = vcmask 261120
    %v119 = vsel %vm118, %v112, 0.0
    %120 = vadd.xlane.f32.xlu0 %v119
    %v121 = vpop.xlane.xlu0 %120
    %v122 = vsel %vm118, %v115, 0.0
    %123 = vadd.xlane.f32.xlu0 %v122
    %v124 = vpop.xlane.xlu0 %123
    %v125 = vmul.f32 %v121, 0.03125
    %v126 = vmul.f32 %v124, 0.03125
    %v127 = vmul.f32 %v112, %v112
    %v128 = vmul.f32 %v115, %v115
    %v129 = vsel %vm118, %v127, 0.0
    %130 = vadd.xlane.f32.xlu0 %v129
    %v131 = vpop.xlane.xlu0 %130
    %v132 = vsel %vm118, %v128, 0.0
    %133 = vadd.xlane.f32.xlu0 %v132
    %v134 = vpop.xlane.xlu0 %133
    %v135 = vmul.f32 %v131, 0.03125
    %v136 = vmul.f32 %v134, 0.03125
    %v137 = vmul.f32 %v125, %v125
    %v138 = vmul.f32 %v126, %v126
    %v139 = vsub.f32 %v135, %v137
    %v140 = vsub.f32 %v136, %v138
    %v141 = vmax.f32 %v139, 0.0
    %v142 = vmax.f32 %v140, 0.0
    %v143 = vadd.f32 %v141, 1e-05
    %v144 = vadd.f32 %v142, 1e-05
    %v145 = vrsqrt.pop %v143
    %v146 = vrsqrt.pop %v144
    %v147 = vlaneseq
    %v148 = vshrl.u32 %v147, 7
    %v149 = vsub.s32 1, %v148
    %v150 = vrot.slane %v55, %v149
    %v151 = vmul.f32 %v150, %v145
    %v152 = vmul.f32 %v150, %v146
    %v153 = vmul.f32 %v125, %v151
    %v154 = vmul.f32 %v126, %v152
    %v155 = vlaneseq
    %v156 = vshrl.u32 %v155, 7
    %v157 = vsub.s32 2, %v156
    %v158 = vrot.slane %v55, %v157
    %v159 = vsub.f32 %v158, %v153
    %v160 = vsub.f32 %v158, %v154
    %v161 = vmul.f32 %v112, %v151
    %v162 = vmul.f32 %v115, %v152
    %v163 = vadd.f32 %v161, %v159
    %v164 = vadd.f32 %v162, %v160
    %v165 = vmax.f32 %v163, 0.0
    %v166 = vmax.f32 %v164, 0.0
    %v167 = vpack.c.bf16 %v166, %v165
    %v168 = vld [vmem:[#allocation4] sm:$0x7]
    %v169 = vld [vmem:[%s3] sm:$0xf]
    %v170 = vld [vmem:[%s3 + $0x4] sm:$0xf]
    %v171 = vld [vmem:[%s3 + $0x8] sm:$0xf]
    %v172 = vld [vmem:[%s3 + $0xc] sm:$0xf]
    %v173 = vlaneseq
    %v174 = vshrl.u32 %v173, 7
    %v175 = vsub.s32 0, %v174
    %v176 = vrot.slane %v168, %v175
    %v181 = vunpack.c.l.b16 %v169
    %v182 = vunpack.c.l.b16 %v170
    %v183 = vunpack.c.l.b16 %v171
    %v184 = vunpack.c.l.b16 %v172
    %v185 = vpack.c.b16 %v182, %v181
    %v186 = vpack.c.b16 %v184, %v183
    %v190 = vsel %vm118, %v167, 0
    %192 = vmatprep.subr.bf16.mxu0 0
    %193 = vmatpush1.bf16.msra.mxu0 %v185
    %194 = vmatprep.subr.bf16.mxu0 0
    %195 = vmatpush1.bf16.msra.mxu0 %v186
    %196 = vmatprep.subr.bf16.mxu0 0
    %197 = vmatpush1.bf16.msra.mxu0 0
    %198 = vmatprep.subr.bf16.mxu0 0
    %199 = vmatpush1.bf16.msra.mxu0 0
    %200 = vmatprep.subr.bf16.mxu0 0
    %201 = vmatpush1.bf16.msra.mxu0 0
    %202 = vmatprep.subr.bf16.mxu0 0
    %203 = vmatpush1.bf16.msra.mxu0 0
    %204 = vmatprep.subr.bf16.mxu0 0
    %205 = vmatpush1.bf16.msra.mxu0 0
    %206 = vmatprep.subr.bf16.mxu0 0
    %207 = vmatpush1.bf16.msra.mxu0 0
    %208 = vmatprep.subr.bf16.mxu0 0
    %209 = vmatpush1.bf16.msra.mxu0 0
    %210 = vmatprep.subr.bf16.mxu0 0
    %211 = vmatpush1.bf16.msra.mxu0 0
    %212 = vmatprep.subr.bf16.mxu0 0
    %213 = vmatpush1.bf16.msra.mxu0 0
    %214 = vmatprep.subr.bf16.mxu0 0
    %215 = vmatpush1.bf16.msra.mxu0 0
    %216 = vmatprep.subr.bf16.mxu0 0
    %217 = vmatpush1.bf16.msra.mxu0 0
    %218 = vmatprep.subr.bf16.mxu0 0
    %219 = vmatpush1.bf16.msra.mxu0 0
    %220 = vmatprep.subr.bf16.mxu0 0
    %221 = vmatpush1.bf16.msra.mxu0 0
    %222 = vmatprep.subr.bf16.mxu0 0
    %223 = vmatpush1.bf16.msra.mxu0 0
    %224 = vmatprep.mubr.bf16.mxu0 0
    %225 = vmatmul.mubr.bf16.gmra.mrb[0].mxu0 %v190
    %v226 = vpop.f32.mrb[0].mxu0
    %v227 = vadd.f32 %v176, %v226
    %v228 = vpop.f32.mrb[0].mxu0
    %v229 = vpop.f32.mrb[0].mxu0
    %v230 = vadd.f32 %v176, %v229
    %v231 = vpop.f32.mrb[0].mxu0
    %232 = vdwg.mxu0
    %v233 = vsel %vm118, %v227, 0.0
    %234 = vadd.xlane.f32.xlu0 %v233
    %v235 = vpop.xlane.xlu0 %234
    %v236 = vsel %vm118, %v230, 0.0
    %237 = vadd.xlane.f32.xlu0 %v236
    %v238 = vpop.xlane.xlu0 %237
    %v239 = vmul.f32 %v235, 0.03125
    %v240 = vmul.f32 %v238, 0.03125
    %v241 = vmul.f32 %v227, %v227
    %v242 = vmul.f32 %v230, %v230
    %v243 = vsel %vm118, %v241, 0.0
    %244 = vadd.xlane.f32.xlu0 %v243
    %v245 = vpop.xlane.xlu0 %244
    %v246 = vsel %vm118, %v242, 0.0
    %247 = vadd.xlane.f32.xlu0 %v246
    %v248 = vpop.xlane.xlu0 %247
    %v249 = vmul.f32 %v245, 0.03125
    %v250 = vmul.f32 %v248, 0.03125
    %v251 = vmul.f32 %v239, %v239
    %v252 = vmul.f32 %v240, %v240
    %v253 = vsub.f32 %v249, %v251
    %v254 = vsub.f32 %v250, %v252
    %v255 = vmax.f32 %v253, 0.0
    %v256 = vmax.f32 %v254, 0.0
    %v257 = vadd.f32 %v255, 1e-05
    %v258 = vadd.f32 %v256, 1e-05
    %v259 = vrsqrt.pop %v257
    %v260 = vrsqrt.pop %v258
    %v261 = vlaneseq
    %v262 = vshrl.u32 %v261, 7
    %v263 = vsub.s32 1, %v262
    %v264 = vrot.slane %v168, %v263
    %v265 = vmul.f32 %v264, %v259
    %v266 = vmul.f32 %v264, %v260
    %v267 = vmul.f32 %v239, %v265
    %v268 = vmul.f32 %v240, %v266
    %v269 = vlaneseq
    %v270 = vshrl.u32 %v269, 7
    %v271 = vsub.s32 2, %v270
    %v272 = vrot.slane %v168, %v271
    %v273 = vsub.f32 %v272, %v267
    %v274 = vsub.f32 %v272, %v268
    %v275 = vmul.f32 %v227, %v265
    %v276 = vmul.f32 %v230, %v266
    %v277 = vadd.f32 %v275, %v273
    %v278 = vadd.f32 %v276, %v274
    %v279 = vmax.f32 %v277, 0.0
    %v280 = vmax.f32 %v278, 0.0
    %v281 = vpack.c.bf16 %v280, %v279
    %v282 = vld [vmem:[%s5] sm:$0xf]
    %v283 = vld [vmem:[%s5 + $0x4] sm:$0xf]
    %v284 = vld [vmem:[%s5 + $0x8] sm:$0xf]
    %v285 = vld [vmem:[%s5 + $0xc] sm:$0xf]
    %v286 = vld [vmem:[%s6] sm:$0x1]
    %v288 = vlaneseq
    %v289 = vshrl.u32 %v288, 7
    %v290 = vsub.s32 0, %v289
    %v291 = vrot.slane %v286, %v290
    %v297 = vunpack.c.l.b16 %v282
    %v298 = vunpack.c.l.b16 %v283
    %v299 = vunpack.c.l.b16 %v284
    %v300 = vunpack.c.l.b16 %v285
    %v301 = vpack.c.b16 %v298, %v297
    %v302 = vpack.c.b16 %v300, %v299
    %v306 = vsel %vm118, %v281, 0
    %308 = vmatprep.subr.bf16.mxu0 0
    %309 = vmatpush1.bf16.msra.mxu0 %v301
    %310 = vmatprep.subr.bf16.mxu0 0
    %311 = vmatpush1.bf16.msra.mxu0 %v302
    %312 = vmatprep.subr.bf16.mxu0 0
    %313 = vmatpush1.bf16.msra.mxu0 0
    %314 = vmatprep.subr.bf16.mxu0 0
    %315 = vmatpush1.bf16.msra.mxu0 0
    %316 = vmatprep.subr.bf16.mxu0 0
    %317 = vmatpush1.bf16.msra.mxu0 0
    %318 = vmatprep.subr.bf16.mxu0 0
    %319 = vmatpush1.bf16.msra.mxu0 0
    %320 = vmatprep.subr.bf16.mxu0 0
    %321 = vmatpush1.bf16.msra.mxu0 0
    %322 = vmatprep.subr.bf16.mxu0 0
    %323 = vmatpush1.bf16.msra.mxu0 0
    %324 = vmatprep.subr.bf16.mxu0 0
    %325 = vmatpush1.bf16.msra.mxu0 0
    %326 = vmatprep.subr.bf16.mxu0 0
    %327 = vmatpush1.bf16.msra.mxu0 0
    %328 = vmatprep.subr.bf16.mxu0 0
    %329 = vmatpush1.bf16.msra.mxu0 0
    %330 = vmatprep.subr.bf16.mxu0 0
    %331 = vmatpush1.bf16.msra.mxu0 0
    %332 = vmatprep.subr.bf16.mxu0 0
    %333 = vmatpush1.bf16.msra.mxu0 0
    %334 = vmatprep.subr.bf16.mxu0 0
    %335 = vmatpush1.bf16.msra.mxu0 0
    %336 = vmatprep.subr.bf16.mxu0 0
    %337 = vmatpush1.bf16.msra.mxu0 0
    %338 = vmatprep.subr.bf16.mxu0 0
    %339 = vmatpush1.bf16.msra.mxu0 0
    %340 = vmatprep.mubr.bf16.mxu0 0
    %341 = vmatmul.mubr.bf16.gmra.mrb[0].mxu0 %v306
    %v342 = vpop.f32.mrb[0].mxu0
    %v343 = vadd.f32 %v291, %v342
    %v344 = vpop.f32.mrb[0].mxu0
    %v345 = vpop.f32.mrb[0].mxu0
    %v346 = vadd.f32 %v291, %v345
    %v347 = vpop.f32.mrb[0].mxu0
    %348 = vdwg.mxu0
    %v349 = vlaneseq
    %v350 = vand.u32 %v349, 127
    %v351 = vmax.f32 %v343, -20.0
    %v352 = vmax.f32 %v346, -20.0
    %v353 = vmin.f32 %v351, 2.0
    %v354 = vmin.f32 %v352, 2.0
    %vm355 = vcmp.ge.s32.totalorder %v350, 4
    %v356 = vsel %vm355, %v353, %v343
    %v357 = vsel %vm355, %v354, %v346
    %vm358 = vcmask 64512
    %359 = vst.msk [vmem:[%s7] sm:$0xff] %vm358, %v356
    %360 = vst.msk [vmem:[%s7 + $0x8] sm:$0xff] %vm358, %v357
    // Predicated region
    $region38: #{tpu_custom_call.1} parent=1 // pred_check
      _
    $region39: #{tpu_custom_call.1} parent=1 // pred_check_branch
      %362 = sbr.rel (0) target = $region41
    $region40: #{tpu_custom_call.1} parent=1 // pred_region
      _
    $region41: #{tpu_custom_call.1} parent=1 // pred_fallthru
      _
    // Predicated region
    $region42: #{tpu_custom_call.1} parent=1 // pred_check
      _
    $region43: #{tpu_custom_call.1} parent=1 // pred_check_branch
      %364 = sbr.rel (0) target = $region45
    $region44: #{tpu_custom_call.1} parent=1 // pred_region
      _
    $region45: #{tpu_custom_call.1} parent=1 // pred_fallthru
      _
    %365 = vsyncpa [#allocation3], 1
    %366 = vsyncpa [#allocation5], 1

</llo_original>
